<compile_context>
chip_gen: v7x
topology: tpu7x:2x2x1
jax: 0.10.0
libtpu: 0.0.40
codegen_flags: <defaults>
</compile_context>

<pallas_src>
import functools

import numpy as np
import jax
import jax.numpy as jnp
from jax.experimental import pallas as pl
from jax.experimental.pallas import tpu as pltpu


@functools.lru_cache(maxsize=None)
def _structure_constants(w_spatial: int, cout: int):
    """Structure-only constants; depend only on (W, Cout). Built once."""
    eye_w = np.eye(w_spatial, dtype=np.float32)
    # Channel-sum matrix: maps per-(w,c) column sums -> per-channel sums,
    # already tiled back across the (w,c) columns.
    cs = np.kron(np.ones((w_spatial, w_spatial), np.float32),
                 np.eye(cout, dtype=np.float32))
    return eye_w, cs


def _conv_bn_relu_kernel(lhs_ref, w_ref, cs_ref, gb_ref, o_ref, *, m, eps):
    # lhs_ref : (N*H, W*KH*KW*Cin)   im2col patches, row=(n,h), col=(w, kh, kw, cin)
    # w_ref   : (W*KH*KW*Cin, W*Cout) block-diagonal conv weight kron(eye(W), w2d)
    # cs_ref  : (W*Cout, W*Cout)      channel-sum matrix kron(ones(W,W), eye(Cout))
    # gb_ref  : (2, W*Cout)           [tiled gamma; tiled beta]
    # o_ref   : (N*H, W*Cout)         lane-dense output slab (128 lanes, unmasked vst)

    # --- Convolution: one MXU matmul, output already lane-dense ---
    acc = jnp.dot(lhs_ref[...], w_ref[...],
                  preferred_element_type=jnp.float32)          # (N*H, W*Cout)

    # --- BatchNorm2d, training mode, single pass (sum & sum of squares) ---
    s = jnp.sum(acc, axis=0, keepdims=True)                    # (1, W*Cout)
    q = jnp.sum(acc * acc, axis=0, keepdims=True)              # (1, W*Cout)
    # Merged fold: ONE (2,128)@(128,128) matmul folds both stats to per-channel
    # values and re-tiles them to the (w,c) column layout (halves the serial
    # MXU push/pop chain vs two M=1 matmuls).
    sq = jnp.concatenate([s, q], axis=0)                       # (2, W*Cout)
    sq_c = jnp.dot(sq, cs_ref[...], preferred_element_type=jnp.float32)

    inv_m = 1.0 / m
    mean = sq_c[0:1, :] * inv_m
    ex2 = sq_c[1:2, :] * inv_m
    var = ex2 - mean * mean                                     # biased batch var
    # TODO(synk): at scale / non-centered activations, switch to two-pass BN to
    # avoid E[x^2]-mean^2 cancellation (see review correctness concern).
    scale = gb_ref[0:1, :] * jax.lax.rsqrt(var + eps)           # gamma*rsqrt(var+eps)
    shift = gb_ref[1:2, :] - mean * scale                       # beta - mean*scale

    # --- Affine + ReLU on full-width vregs, dense store ---
    y = jnp.maximum(acc * scale + shift, 0.0)
    o_ref[...] = y.astype(o_ref.dtype)


@functools.partial(jax.jit, static_argnames=("eps",))
def conv_block_forward(x_nchw, w_hwio, gamma, beta, eps=1e-5):
    """ConvBnActiv forward. x_nchw: (N, Cin, H, W) float32."""
    N, Cin, H, W = x_nchw.shape
    KH, KW, Cin_w, Cout = w_hwio.shape
    assert Cin == Cin_w
    # Lane-dense block-diagonal trick assumptions (review correctness concern).
    assert W * Cout == 128, "kron trick requires W*Cout == 128 (lane-dense slab)"
    assert (N * H) % 8 == 0, "row count should be sublane-dense (multiple of 8)"

    ph, pw = KH // 2, KW // 2  # SAME padding, stride 1, dilation 1
    k_taps = KH * KW * Cin
    dt = x_nchw.dtype

    # ---- wrapper-side layout plumbing (tiny data, fused under jit) ----
    x_nhwc = jnp.transpose(x_nchw, (0, 2, 3, 1))
    x_pad = jnp.pad(x_nhwc, ((0, 0), (ph, ph), (pw, pw), (0, 0)))

    # im2col: tap order (kh, kw, cin) with cin fastest -> matches
    # w_hwio.reshape(KH*KW*Cin, Cout).
    taps = [x_pad[:, kh:kh + H, kw:kw + W, :]
            for kh in range(KH) for kw in range(KW)]
    patches = jnp.concatenate(taps, axis=-1)                    # (N, H, W, k_taps)
    lhs = patches.reshape(N * H, W * k_taps)                    # (32, 576)

    # Hoisted structure-only constants (baked into the jitted graph).
    eye_w, cs_np = _structure_constants(W, Cout)

    w2d = w_hwio.reshape(k_taps, Cout).astype(dt)               # (36, 8)
    w_bd = jnp.kron(eye_w.astype(dt), w2d)                      # (576, 128)
    cs = jnp.asarray(cs_np, dtype=dt)                           # (128, 128) constant

    gb = jnp.stack([jnp.tile(gamma.astype(dt), W),
                    jnp.tile(beta.astype(dt), W)], axis=0)      # (2, 128)

    kernel = functools.partial(_conv_bn_relu_kernel,
                               m=float(N * H * W), eps=float(eps))

    rows, cols_k, cols_n = N * H, W * k_taps, W * Cout
    cost = pl.CostEstimate(
        flops=2 * rows * cols_k * cols_n          # main conv matmul
              + 2 * 2 * cols_n * cols_n           # BN fold matmul
              + 6 * rows * cols_n,                # stats + affine + relu
        transcendentals=cols_n,                   # rsqrt over one vreg row
        bytes_accessed=4 * (rows * cols_k + cols_k * cols_n
                            + cols_n * cols_n + 2 * cols_n + rows * cols_n),
    )

    out2d = pl.pallas_call(
        kernel,
        out_shape=jax.ShapeDtypeStruct((rows, cols_n), dt),
        grid=(1,),
        in_specs=[
            pl.BlockSpec(lhs.shape, lambda i: (0, 0)),
            pl.BlockSpec(w_bd.shape, lambda i: (0, 0)),
            pl.BlockSpec(cs.shape, lambda i: (0, 0)),
            pl.BlockSpec(gb.shape, lambda i: (0, 0)),
        ],
        out_specs=pl.BlockSpec((rows, cols_n), lambda i: (0, 0)),
        compiler_params=pltpu.CompilerParams(
            dimension_semantics=("arbitrary",)),
        cost_estimate=cost,
    )(lhs, w_bd, cs, gb)

    # (N*H, W*Cout) row=(n,h) col=(w,c)  ->  NHWC  ->  NCHW
    out_nhwc = out2d.reshape(N, H, W, Cout)
    return jnp.transpose(out_nhwc, (0, 3, 1, 2))


def _reference(x_nchw, w_hwio, gamma, beta, eps=1e-5):
    """Plain-JAX reference: conv2d SAME -> training-mode BN -> ReLU."""
    y = jax.lax.conv_general_dilated(
        x_nchw, w_hwio, window_strides=(1, 1), padding='SAME',
        dimension_numbers=('NCHW', 'HWIO', 'NCHW'))
    mean = jnp.mean(y, axis=(0, 2, 3), keepdims=True)
    var = jnp.mean(jnp.square(y - mean), axis=(0, 2, 3), keepdims=True)
    yhat = (y - mean) * jax.lax.rsqrt(var + eps)
    yhat = yhat * gamma.reshape(1, -1, 1, 1) + beta.reshape(1, -1, 1, 1)
    return jnp.maximum(yhat, 0.0)


if __name__ == "__main__":
    key = jax.random.PRNGKey(0)
    k_x, k_w, k_g, k_b = jax.random.split(key, 4)

    N, Cin, H, W = 2, 4, 16, 16
    Cout, KH, KW = 8, 3, 3

    x = jax.random.normal(k_x, (N, Cin, H, W), jnp.float32)
    # Kaiming-style deterministic init for the conv weight (HWIO).
    fan_in = Cin * KH * KW
    w = jax.random.normal(k_w, (KH, KW, Cin, Cout), jnp.float32) * jnp.sqrt(2.0 / fan_in)
    # Deterministic (non-trivial) BN affine params.
    gamma = 1.0 + 0.1 * jax.random.normal(k_g, (Cout,), jnp.float32)
    beta = 0.1 * jax.random.normal(k_b, (Cout,), jnp.float32)

    out = conv_block_forward(x, w, gamma, beta)
    out = jax.block_until_ready(out)

    ref = _reference(x, w, gamma, beta)
    assert out.shape == (N, Cout, H, W)
    assert jnp.allclose(out, ref, atol=1e-4, rtol=1e-4), \
        f"max abs err {jnp.max(jnp.abs(out - ref))}"

    print("KERNEL_OK")
</pallas_src>

<mosaic_0001>
module attributes {stable_mosaic.version = 11 : i64} {
  func.func @_conv_bn_relu_kernel(%arg0: i32, %arg1: memref<32x576xf32, #tpu.memory_space<vmem>>, %arg2: memref<576x128xf32, #tpu.memory_space<vmem>>, %arg3: memref<128x128xf32, #tpu.memory_space<vmem>>, %arg4: memref<2x128xf32, #tpu.memory_space<vmem>>, %arg5: memref<32x128xf32, #tpu.memory_space<vmem>>) attributes {dimension_semantics = [#tpu.dimension_semantics<arbitrary>], iteration_bounds = array<i64: 1>, scalar_prefetch = 0 : i64, scratch_operands = 0 : i64, tpu.core_type = #tpu.core_type<tc>, window_params = [{pipeline_mode = #tpu.pipeline_mode<synchronous>, transform_indices = @transform_0, window_bounds = array<i64: 32, 576>}, {pipeline_mode = #tpu.pipeline_mode<synchronous>, transform_indices = @transform_1, window_bounds = array<i64: 576, 128>}, {pipeline_mode = #tpu.pipeline_mode<synchronous>, transform_indices = @transform_2, window_bounds = array<i64: 128, 128>}, {pipeline_mode = #tpu.pipeline_mode<synchronous>, transform_indices = @transform_3, window_bounds = array<i64: 2, 128>}, {pipeline_mode = #tpu.pipeline_mode<synchronous>, transform_indices = @transform_4, window_bounds = array<i64: 32, 128>}]} {
    %c0 = arith.constant 0 : index
    %c0_0 = arith.constant 0 : index
    %0 = vector.load %arg1[%c0, %c0_0] : memref<32x576xf32, #tpu.memory_space<vmem>>, vector<32x576xf32>
    %c0_1 = arith.constant 0 : index
    %c0_2 = arith.constant 0 : index
    %1 = vector.load %arg2[%c0_1, %c0_2] : memref<576x128xf32, #tpu.memory_space<vmem>>, vector<576x128xf32>
    %cst = arith.constant dense<0.000000e+00> : vector<32x128xf32>
    %2 = tpu.matmul %0, %1, %cst {dimension_numbers = #tpu.dot_dimension_numbers<[1], [0], [0], [1], [0, 0, 1, 1], [], []>} : vector<32x576xf32>, vector<576x128xf32>, vector<32x128xf32> -> vector<32x128xf32>
    %cst_3 = arith.constant dense<0.000000e+00> : vector<128xf32>
    %3 = vector.multi_reduction <add>, %2, %cst_3 [0] : vector<32x128xf32> to vector<128xf32>
    %4 = vector.shape_cast %3 : vector<128xf32> to vector<1x128xf32>
    %5 = arith.mulf %2, %2 : vector<32x128xf32>
    %cst_4 = arith.constant dense<0.000000e+00> : vector<128xf32>
    %6 = vector.multi_reduction <add>, %5, %cst_4 [0] : vector<32x128xf32> to vector<128xf32>
    %7 = vector.shape_cast %6 : vector<128xf32> to vector<1x128xf32>
    %8 = tpu.concatenate %4, %7 in 0 : vector<1x128xf32>, vector<1x128xf32> -> vector<2x128xf32>
    %c0_5 = arith.constant 0 : index
    %c0_6 = arith.constant 0 : index
    %9 = vector.load %arg3[%c0_5, %c0_6] : memref<128x128xf32, #tpu.memory_space<vmem>>, vector<128x128xf32>
    %cst_7 = arith.constant dense<0.000000e+00> : vector<2x128xf32>
    %10 = tpu.matmul %8, %9, %cst_7 {dimension_numbers = #tpu.dot_dimension_numbers<[1], [0], [0], [1], [0, 0, 1, 1], [], []>} : vector<2x128xf32>, vector<128x128xf32>, vector<2x128xf32> -> vector<2x128xf32>
    %11 = vector.extract_strided_slice %10 {offsets = [0, 0], sizes = [1, 128], strides = [1, 1]} : vector<2x128xf32> to vector<1x128xf32>
    %cst_8 = arith.constant 0.001953125 : f32
    %12 = vector.broadcast %cst_8 : f32 to vector<1x128xf32>
    %13 = arith.mulf %11, %12 : vector<1x128xf32>
    %14 = vector.extract_strided_slice %10 {offsets = [1, 0], sizes = [1, 128], strides = [1, 1]} : vector<2x128xf32> to vector<1x128xf32>
    %cst_9 = arith.constant 0.001953125 : f32
    %15 = vector.broadcast %cst_9 : f32 to vector<1x128xf32>
    %16 = arith.mulf %14, %15 : vector<1x128xf32>
    %17 = arith.mulf %13, %13 : vector<1x128xf32>
    %18 = arith.subf %16, %17 : vector<1x128xf32>
    %c0_10 = arith.constant 0 : index
    %c0_11 = arith.constant 0 : index
    %19 = vector.load %arg4[%c0_10, %c0_11] : memref<2x128xf32, #tpu.memory_space<vmem>>, vector<1x128xf32>
    %cst_12 = arith.constant 9.99999974E-6 : f32
    %20 = vector.broadcast %cst_12 : f32 to vector<1x128xf32>
    %21 = arith.addf %18, %20 : vector<1x128xf32>
    %22 = math.rsqrt %21 : vector<1x128xf32>
    %23 = arith.mulf %19, %22 : vector<1x128xf32>
    %c1 = arith.constant 1 : index
    %c0_13 = arith.constant 0 : index
    %24 = vector.load %arg4[%c1, %c0_13] : memref<2x128xf32, #tpu.memory_space<vmem>>, vector<1x128xf32>
    %25 = arith.mulf %13, %23 : vector<1x128xf32>
    %26 = arith.subf %24, %25 : vector<1x128xf32>
    %27 = vector.broadcast %23 : vector<1x128xf32> to vector<32x128xf32>
    %28 = arith.mulf %2, %27 : vector<32x128xf32>
    %29 = vector.broadcast %26 : vector<1x128xf32> to vector<32x128xf32>
    %30 = arith.addf %28, %29 : vector<32x128xf32>
    %cst_14 = arith.constant 0.000000e+00 : f32
    %31 = vector.broadcast %cst_14 : f32 to vector<32x128xf32>
    %32 = arith.maximumf %30, %31 : vector<32x128xf32>
    %c0_15 = arith.constant 0 : index
    %c0_16 = arith.constant 0 : index
    %33 = vector.load %arg5[%c0_15, %c0_16] : memref<32x128xf32, #tpu.memory_space<vmem>>, vector<32x128xf32>
    tpu.vector_store %arg5[%c0_15, %c0_16], %32 {strides = array<i32>} : memref<32x128xf32, #tpu.memory_space<vmem>>, vector<32x128xf32>,
    return
  }
  func.func @transform_0(%arg0: i32) -> (i32, i32) {
    %c0_i32 = arith.constant 0 : i32
    %c0_i32_0 = arith.constant 0 : i32
    %c0_i32_1 = arith.constant 0 : i32
    return %c0_i32, %c0_i32_0 : i32, i32
  }
  func.func @transform_1(%arg0: i32) -> (i32, i32) {
    %c0_i32 = arith.constant 0 : i32
    %c0_i32_0 = arith.constant 0 : i32
    %c0_i32_1 = arith.constant 0 : i32
    return %c0_i32, %c0_i32_0 : i32, i32
  }
  func.func @transform_2(%arg0: i32) -> (i32, i32) {
    %c0_i32 = arith.constant 0 : i32
    %c0_i32_0 = arith.constant 0 : i32
    %c0_i32_1 = arith.constant 0 : i32
    return %c0_i32, %c0_i32_0 : i32, i32
  }
  func.func @transform_3(%arg0: i32) -> (i32, i32) {
    %c0_i32 = arith.constant 0 : i32
    %c0_i32_0 = arith.constant 0 : i32
    %c0_i32_1 = arith.constant 0 : i32
    return %c0_i32, %c0_i32_0 : i32, i32
  }
  func.func @transform_4(%arg0: i32) -> (i32, i32) {
    %c0_i32 = arith.constant 0 : i32
    %c0_i32_0 = arith.constant 0 : i32
    %c0_i32_1 = arith.constant 0 : i32
    return %c0_i32, %c0_i32_0 : i32, i32
  }
}

</mosaic_0001>

<llo_original>
// kernel: mul.4
$region0: #{mul.4}
  %s0 = inlined_call_operand.vmem [shape: f32[3,3,4,8], index: 0, kind: input, shape index: {}]
  %s1 = inlined_call_operand.vmem [shape: f32[36,8], index: 1, kind: output, shape index: {}]
  $region1: #{mul.4} parent=0
    #allocation0 [shape = 'u8[36864]{0}', space=vmem, size = 0x9000, scoped, tag = 'scoped mem for input reshape']
    %s3 = sshllo.u32 0, 4
    %s4 = smul.addr 4, 8
    %s5 = scalar_lea.vmem %s0, %s4
    %v6 = vld [vmem:[%s5] sm:%s3]
    %s7 = scalar_lea.vmem [#allocation0], 64
    %8 = vst [vmem:[%s7] sm:%s3] %v6
    %s9 = smul.addr 4, 7
    %s10 = scalar_lea.vmem %s0, %s9
    %v11 = vld [vmem:[%s10] sm:%s3]
    %s12 = scalar_lea.vmem [#allocation0], 56
    %13 = vst [vmem:[%s12] sm:%s3] %v11
    %s14 = smul.addr 4, 6
    %s15 = scalar_lea.vmem %s0, %s14
    %v16 = vld [vmem:[%s15] sm:%s3]
    %s17 = scalar_lea.vmem [#allocation0], 48
    %18 = vst [vmem:[%s17] sm:%s3] %v16
    %s19 = smul.addr 4, 5
    %s20 = scalar_lea.vmem %s0, %s19
    %v21 = vld [vmem:[%s20] sm:%s3]
    %s22 = scalar_lea.vmem [#allocation0], 40
    %23 = vst [vmem:[%s22] sm:%s3] %v21
    %s24 = smul.addr 4, 4
    %s25 = scalar_lea.vmem %s0, %s24
    %v26 = vld [vmem:[%s25] sm:%s3]
    %s27 = scalar_lea.vmem [#allocation0], 32
    %28 = vst [vmem:[%s27] sm:%s3] %v26
    %s29 = smul.addr 4, 3
    %s30 = scalar_lea.vmem %s0, %s29
    %v31 = vld [vmem:[%s30] sm:%s3]
    %s32 = scalar_lea.vmem [#allocation0], 24
    %33 = vst [vmem:[%s32] sm:%s3] %v31
    %s34 = smul.addr 4, 2
    %s35 = scalar_lea.vmem %s0, %s34
    %v36 = vld [vmem:[%s35] sm:%s3]
    %s37 = scalar_lea.vmem [#allocation0], 16
    %38 = vst [vmem:[%s37] sm:%s3] %v36
    %s39 = scalar_lea.vmem %s0, 4
    %v40 = vld [vmem:[%s39] sm:%s3]
    %s41 = scalar_lea.vmem [#allocation0], 8
    %42 = vst [vmem:[%s41] sm:%s3] %v40
    %v43 = vld [vmem:[%s0] sm:%s3]
    %44 = vst [vmem:[#allocation0] sm:%s3] %v43
    %v45 = vld [vmem:[#allocation0] sm:$0xf]
    %vm46 = vcmask 64512
    %47 = vst.msk [vmem:[%s1] sm:$0xf] %vm46, %v45
    %s48 = scalar_lea.vmem [#allocation0], 8
    %v49 = vld [vmem:[%s48] sm:$0xf]
    %vm50 = vcmask 64512
    %s51 = scalar_lea.vmem %s1, 4
    %52 = vst.msk [vmem:[%s51] sm:$0xf] %vm50, %v49
    %s53 = scalar_lea.vmem [#allocation0], 16
    %v54 = vld [vmem:[%s53] sm:$0xf]
    %vm55 = vcmask 64512
    %s56 = scalar_lea.vmem %s1, 8
    %57 = vst.msk [vmem:[%s56] sm:$0xf] %vm55, %v54
    %s58 = scalar_lea.vmem [#allocation0], 24
    %v59 = vld [vmem:[%s58] sm:$0xf]
    %vm60 = vcmask 64512
    %s61 = scalar_lea.vmem %s1, 12
    %62 = vst.msk [vmem:[%s61] sm:$0xf] %vm60, %v59
    %s63 = scalar_lea.vmem [#allocation0], 32
    %v64 = vld [vmem:[%s63] sm:$0xf]
    %vm65 = vcmask 64512
    %s66 = scalar_lea.vmem %s1, 16
    %67 = vst.msk [vmem:[%s66] sm:$0xf] %vm65, %v64
    %s68 = scalar_lea.vmem [#allocation0], 40
    %v69 = vld [vmem:[%s68] sm:$0xf]
    %vm70 = vcmask 64512
    %s71 = scalar_lea.vmem %s1, 20
    %72 = vst.msk [vmem:[%s71] sm:$0xf] %vm70, %v69
    %s73 = scalar_lea.vmem [#allocation0], 48
    %v74 = vld [vmem:[%s73] sm:$0xf]
    %vm75 = vcmask 64512
    %s76 = scalar_lea.vmem %s1, 24
    %77 = vst.msk [vmem:[%s76] sm:$0xf] %vm75, %v74
    %s78 = scalar_lea.vmem [#allocation0], 56
    %v79 = vld [vmem:[%s78] sm:$0xf]
    %vm80 = vcmask 64512
    %s81 = scalar_lea.vmem %s1, 28
    %82 = vst.msk [vmem:[%s81] sm:$0xf] %vm80, %v79
    %s83 = scalar_lea.vmem [#allocation0], 64
    %v84 = vld [vmem:[%s83] sm:$0xf]
    %vm85 = vcmask 64512
    %s86 = scalar_lea.vmem %s1, 32
    %87 = vst.msk [vmem:[%s86] sm:$0xf] %vm85, %v84

// kernel: tile.13
$region0: #{tile.13}
  #allocation0 [shape = 's32[1]{0}', space=sflag, size = 0x4, scoped, tag = 'scoped memory for tile.13']
  %s0 = inlined_call_operand.vmem [shape: f32[8], index: 0, kind: input, shape index: {}]
  %s1 = inlined_call_operand.vmem [shape: f32[16,8], index: 1, kind: output, shape index: {}]
  // Predicated region
  $region2: #{tile.13} parent=0 // pred_check
    _
  $region3: #{tile.13} parent=0 // pred_check_branch
    %3 = sbr.rel (0) target = $region5
  $region4: #{tile.13} parent=0 // pred_region
    _
  $region5: #{tile.13} parent=0 // pred_fallthru
    _
  %v4 = vld [vmem:[%s0] ss:$0 sm:$0xff]
  %5 = vst [vmem:[%s1] sm:$0xff] %v4
  %s6 = scalar_lea.vmem %s1, 8
  %7 = vst [vmem:[%s6] sm:$0xff] %v4

// kernel: tile.18
$region0: #{tile.18}
  %s0 = inlined_call_operand.vmem [shape: f32[16,8], index: 0, kind: input, shape index: {}]
  %s1 = inlined_call_operand.vmem [shape: f32[1,128], index: 1, kind: output, shape index: {}]
  $region1: #{tile.18} parent=0
    #allocation0 [shape = 'u8[4096]{0}', space=vmem, size = 0x1000, scoped, tag = 'scoped mem for output reshape']
    %v2 = vld [vmem:[%s0] sm:$0x1]
    %vm3 = vcmask 64512
    %4 = vst.msk [vmem:[#allocation0] sm:$0x1] %vm3, %v2
    %s5 = scalar_lea.vmem %s0, 15
    %v6 = vld [vmem:[%s5] sm:$0x1]
    %7 = vrot.lane.b32.xlu0 %v6, 120
    %v8 = vpop.permute.xlu0 %7
    %vm9 = vcmask 1048512
    %10 = vst.msk [vmem:[#allocation0] sm:$0x1] %vm9, %v8
    %s11 = scalar_lea.vmem %s0, 14
    %v12 = vld [vmem:[%s11] sm:$0x1]
    %13 = vrot.lane.b32.xlu0 %v12, 112
    %v14 = vpop.permute.xlu0 %13
    %vm15 = vcmask 982912
    %16 = vst.msk [vmem:[#allocation0] sm:$0x1] %vm15, %v14
    %s17 = scalar_lea.vmem %s0, 13
    %v18 = vld [vmem:[%s17] sm:$0x1]
    %19 = vrot.lane.b32.xlu0 %v18, 104
    %v20 = vpop.permute.xlu0 %19
    %vm21 = vcmask 917312
    %22 = vst.msk [vmem:[#allocation0] sm:$0x1] %vm21, %v20
    %s23 = scalar_lea.vmem %s0, 12
    %v24 = vld [vmem:[%s23] sm:$0x1]
    %25 = vrot.lane.b32.xlu0 %v24, 96
    %v26 = vpop.permute.xlu0 %25
    %vm27 = vcmask 851712
    %28 = vst.msk [vmem:[#allocation0] sm:$0x1] %vm27, %v26
    %s29 = scalar_lea.vmem %s0, 11
    %v30 = vld [vmem:[%s29] sm:$0x1]
    %31 = vrot.lane.b32.xlu0 %v30, 88
    %v32 = vpop.permute.xlu0 %31
    %vm33 = vcmask 786112
    %34 = vst.msk [vmem:[#allocation0] sm:$0x1] %vm33, %v32
    %s35 = scalar_lea.vmem %s0, 10
    %v36 = vld [vmem:[%s35] sm:$0x1]
    %37 = vrot.lane.b32.xlu0 %v36, 80
    %v38 = vpop.permute.xlu0 %37
    %vm39 = vcmask 720512
    %40 = vst.msk [vmem:[#allocation0] sm:$0x1] %vm39, %v38
    %s41 = scalar_lea.vmem %s0, 9
    %v42 = vld [vmem:[%s41] sm:$0x1]
    %43 = vrot.lane.b32.xlu0 %v42, 72
    %v44 = vpop.permute.xlu0 %43
    %vm45 = vcmask 654912
    %46 = vst.msk [vmem:[#allocation0] sm:$0x1] %vm45, %v44
    %s47 = scalar_lea.vmem %s0, 8
    %v48 = vld [vmem:[%s47] sm:$0x1]
    %49 = vrot.lane.b32.xlu0 %v48, 64
    %v50 = vpop.permute.xlu0 %49
    %vm51 = vcmask 589312
    %52 = vst.msk [vmem:[#allocation0] sm:$0x1] %vm51, %v50
    %s53 = scalar_lea.vmem %s0, 7
    %v54 = vld [vmem:[%s53] sm:$0x1]
    %55 = vrot.lane.b32.xlu0 %v54, 56
    %v56 = vpop.permute.xlu0 %55
    %vm57 = vcmask 523712
    %58 = vst.msk [vmem:[#allocation0] sm:$0x1] %vm57, %v56
    %s59 = scalar_lea.vmem %s0, 6
    %v60 = vld [vmem:[%s59] sm:$0x1]
    %61 = vrot.lane.b32.xlu0 %v60, 48
    %v62 = vpop.permute.xlu0 %61
    %vm63 = vcmask 458112
    %64 = vst.msk [vmem:[#allocation0] sm:$0x1] %vm63, %v62
    %s65 = scalar_lea.vmem %s0, 5
    %v66 = vld [vmem:[%s65] sm:$0x1]
    %67 = vrot.lane.b32.xlu0 %v66, 40
    %v68 = vpop.permute.xlu0 %67
    %vm69 = vcmask 392512
    %70 = vst.msk [vmem:[#allocation0] sm:$0x1] %vm69, %v68
    %s71 = scalar_lea.vmem %s0, 4
    %v72 = vld [vmem:[%s71] sm:$0x1]
    %73 = vrot.lane.b32.xlu0 %v72, 32
    %v74 = vpop.permute.xlu0 %73
    %vm75 = vcmask 326912
    %76 = vst.msk [vmem:[#allocation0] sm:$0x1] %vm75, %v74
    %s77 = scalar_lea.vmem %s0, 3
    %v78 = vld [vmem:[%s77] sm:$0x1]
    %79 = vrot.lane.b32.xlu0 %v78, 24
    %v80 = vpop.permute.xlu0 %79
    %vm81 = vcmask 261312
    %82 = vst.msk [vmem:[#allocation0] sm:$0x1] %vm81, %v80
    %s83 = scalar_lea.vmem %s0, 2
    %v84 = vld [vmem:[%s83] sm:$0x1]
    %85 = vrot.lane.b32.xlu0 %v84, 16
    %v86 = vpop.permute.xlu0 %85
    %vm87 = vcmask 195712
    %88 = vst.msk [vmem:[#allocation0] sm:$0x1] %vm87, %v86
    %s89 = scalar_lea.vmem %s0, 1
    %v90 = vld [vmem:[%s89] sm:$0x1]
    %91 = vrot.lane.b32.xlu0 %v90, 8
    %v92 = vpop.permute.xlu0 %91
    %vm93 = vcmask 130112
    %94 = vst.msk [vmem:[#allocation0] sm:$0x1] %vm93, %v92
    %s96 = sshllo.u32 0, 1
    %v98 = vld [vmem:[#allocation0] sm:%s96]
    %s99 = sshllo.u32 0, 1
    %100 = vst [vmem:[%s1] sm:%s99] %v98

// kernel: conv_block_forward.1
$region0: #{conv_block_forward.1}
  #allocation0 [shape = 'u32[]', space=smem, size = 0x4, offset = 0x4, fixed_abs, tag = 'smem constant byte address 0x4 - core index']
  #allocation1 [shape = 'u32[144,128]{1,0:T(1,128)}', space=vmem, size = 0x12000, scoped, tag = 'internal scratch']
  %s0 = inlined_call_operand.vmem [shape: f32[32,576], index: 0, kind: input, shape index: {}]
  %s1 = inlined_call_operand.vmem [shape: f32[576,128], index: 1, kind: input, shape index: {}]
  %s2 = inlined_call_operand.vmem [shape: f32[128,128], index: 2, kind: input, shape index: {}]
  %s3 = inlined_call_operand.vmem [shape: f32[2,128], index: 3, kind: input, shape index: {}]
  %s4 = inlined_call_operand.vmem [shape: f32[32,128], index: 4, kind: output, shape index: {}]
  %s5 = sld [smem:[#allocation0]]
  $region26: #{conv_block_forward.1} parent=0
    _
  %s7 = ssub.s32 1, %s5
  %s8 = scalar_select 0, %s7, %s5
  // Predicated region
  $region2: #{conv_block_forward.1} parent=0 // pred_check
    _
  $region3: #{conv_block_forward.1} parent=0 // pred_check_branch
    %10 = sbr.rel (0) target = $region5
  $region4: #{conv_block_forward.1} parent=0 // pred_region
    _
  $region5: #{conv_block_forward.1} parent=0 // pred_fallthru
    _
  // Predicated region
  $region6: #{conv_block_forward.1} parent=0 // pred_check
    _
  $region7: #{conv_block_forward.1} parent=0 // pred_check_branch
    %12 = sbr.rel (0) target = $region9
  $region8: #{conv_block_forward.1} parent=0 // pred_region
    _
  $region9: #{conv_block_forward.1} parent=0 // pred_fallthru
    _
  // Predicated region
  $region10: #{conv_block_forward.1} parent=0 // pred_check
    _
  $region11: #{conv_block_forward.1} parent=0 // pred_check_branch
    %14 = sbr.rel (0) target = $region13
  $region12: #{conv_block_forward.1} parent=0 // pred_region
    _
  $region13: #{conv_block_forward.1} parent=0 // pred_fallthru
    _
  // Predicated region
  $region14: #{conv_block_forward.1} parent=0 // pred_check
    _
  $region15: #{conv_block_forward.1} parent=0 // pred_check_branch
    %16 = sbr.rel (0) target = $region17
  $region16: #{conv_block_forward.1} parent=0 // pred_region
    _
  $region17: #{conv_block_forward.1} parent=0 // pred_fallthru
    _
  %v17 = vld [vmem:[%s0] sm:$0xff]
  %v18 = vld [vmem:[%s0 + $0x8] sm:$0xff]
  %v19 = vld [vmem:[%s0 + $0x10] sm:$0xff]
  %v20 = vld [vmem:[%s0 + $0x18] sm:$0xff]
  %v21 = vld [vmem:[%s0 + $0x20] sm:$0xff]
  %v22 = vld [vmem:[%s0 + $0x28] sm:$0xff]
  %v23 = vld [vmem:[%s0 + $0x30] sm:$0xff]
  %v24 = vld [vmem:[%s0 + $0x38] sm:$0xff]
  %v25 = vld [vmem:[%s0 + $0x40] sm:$0xff]
  %v26 = vld [vmem:[%s0 + $0x48] sm:$0xff]
  %v27 = vld [vmem:[%s0 + $0x50] sm:$0xff]
  %v28 = vld [vmem:[%s0 + $0x58] sm:$0xff]
  %v29 = vld [vmem:[%s0 + $0x60] sm:$0xff]
  %v30 = vld [vmem:[%s0 + $0x68] sm:$0xff]
  %v31 = vld [vmem:[%s0 + $0x70] sm:$0xff]
  %v32 = vld [vmem:[%s0 + $0x78] sm:$0xff]
  %v33 = vld [vmem:[%s0 + $0x80] sm:$0xff]
  %v34 = vld [vmem:[%s0 + $0x88] sm:$0xff]
  %v35 = vld [vmem:[%s0 + $0x90] sm:$0xff]
  %v36 = vld [vmem:[%s0 + $0x98] sm:$0xff]
  %v37 = vld [vmem:[%s1] sm:$0xff]
  %v38 = vld [vmem:[%s1 + $0x8] sm:$0xff]
  %v39 = vld [vmem:[%s1 + $0x10] sm:$0xff]
  %v40 = vld [vmem:[%s1 + $0x18] sm:$0xff]
  %v41 = vld [vmem:[%s1 + $0x20] sm:$0xff]
  %v42 = vld [vmem:[%s1 + $0x28] sm:$0xff]
  %v43 = vld [vmem:[%s1 + $0x30] sm:$0xff]
  %v44 = vld [vmem:[%s1 + $0x38] sm:$0xff]
  %v45 = vld [vmem:[%s1 + $0x40] sm:$0xff]
  %v46 = vld [vmem:[%s1 + $0x48] sm:$0xff]
  %v47 = vld [vmem:[%s1 + $0x50] sm:$0xff]
  %v48 = vld [vmem:[%s1 + $0x58] sm:$0xff]
  %v49 = vld [vmem:[%s1 + $0x60] sm:$0xff]
  %v50 = vld [vmem:[%s1 + $0x68] sm:$0xff]
  %v51 = vld [vmem:[%s1 + $0x70] sm:$0xff]
  %v52 = vld [vmem:[%s1 + $0x78] sm:$0xff]
  %v53 = vld [vmem:[%s1 + $0x80] sm:$0xff]
  %v54 = vld [vmem:[%s1 + $0x88] sm:$0xff]
  %v55 = vld [vmem:[%s1 + $0x90] sm:$0xff]
  %v56 = vld [vmem:[%s1 + $0x98] sm:$0xff]
  %v57 = vld [vmem:[%s1 + $0xa0] sm:$0xff]
  %v58 = vld [vmem:[%s1 + $0xa8] sm:$0xff]
  %v59 = vld [vmem:[%s1 + $0xb0] sm:$0xff]
  %v60 = vld [vmem:[%s1 + $0xb8] sm:$0xff]
  %v61 = vld [vmem:[%s1 + $0xc0] sm:$0xff]
  %v62 = vld [vmem:[%s1 + $0xc8] sm:$0xff]
  %v63 = vld [vmem:[%s1 + $0xd0] sm:$0xff]
  %v64 = vld [vmem:[%s1 + $0xd8] sm:$0xff]
  %v65 = vld [vmem:[%s1 + $0xe0] sm:$0xff]
  %v66 = vld [vmem:[%s1 + $0xe8] sm:$0xff]
  %v67 = vld [vmem:[%s1 + $0xf0] sm:$0xff]
  %v68 = vld [vmem:[%s1 + $0xf8] sm:$0xff]
  %v69 = vld [vmem:[%s1 + $0x100] sm:$0xff]
  %v70 = vld [vmem:[%s1 + $0x108] sm:$0xff]
  %v71 = vld [vmem:[%s1 + $0x110] sm:$0xff]
  %v72 = vld [vmem:[%s1 + $0x118] sm:$0xff]
  %v73 = vld [vmem:[%s1 + $0x120] sm:$0xff]
  %v74 = vld [vmem:[%s1 + $0x128] sm:$0xff]
  %v75 = vld [vmem:[%s1 + $0x130] sm:$0xff]
  %v76 = vld [vmem:[%s1 + $0x138] sm:$0xff]
  %v77 = vld [vmem:[%s1 + $0x140] sm:$0xff]
  %v78 = vld [vmem:[%s1 + $0x148] sm:$0xff]
  %v79 = vld [vmem:[%s1 + $0x150] sm:$0xff]
  %v80 = vld [vmem:[%s1 + $0x158] sm:$0xff]
  %v81 = vld [vmem:[%s1 + $0x160] sm:$0xff]
  %v82 = vld [vmem:[%s1 + $0x168] sm:$0xff]
  %v83 = vld [vmem:[%s1 + $0x170] sm:$0xff]
  %v84 = vld [vmem:[%s1 + $0x178] sm:$0xff]
  %v85 = vld [vmem:[%s1 + $0x180] sm:$0xff]
  %v86 = vld [vmem:[%s1 + $0x188] sm:$0xff]
  %v87 = vld [vmem:[%s1 + $0x190] sm:$0xff]
  %v88 = vld [vmem:[%s1 + $0x198] sm:$0xff]
  %v89 = vld [vmem:[%s1 + $0x1a0] sm:$0xff]
  %v90 = vld [vmem:[%s1 + $0x1a8] sm:$0xff]
  %v91 = vld [vmem:[%s1 + $0x1b0] sm:$0xff]
  %v92 = vld [vmem:[%s1 + $0x1b8] sm:$0xff]
  %v93 = vld [vmem:[%s1 + $0x1c0] sm:$0xff]
  %v94 = vld [vmem:[%s1 + $0x1c8] sm:$0xff]
  %v95 = vld [vmem:[%s1 + $0x1d0] sm:$0xff]
  %v96 = vld [vmem:[%s1 + $0x1d8] sm:$0xff]
  %v97 = vld [vmem:[%s1 + $0x1e0] sm:$0xff]
  %v98 = vld [vmem:[%s1 + $0x1e8] sm:$0xff]
  %v99 = vld [vmem:[%s1 + $0x1f0] sm:$0xff]
  %v100 = vld [vmem:[%s1 + $0x1f8] sm:$0xff]
  %v101 = vld [vmem:[%s1 + $0x200] sm:$0xff]
  %v102 = vld [vmem:[%s1 + $0x208] sm:$0xff]
  %v103 = vld [vmem:[%s1 + $0x210] sm:$0xff]
  %v104 = vld [vmem:[%s1 + $0x218] sm:$0xff]
  %v105 = vld [vmem:[%s1 + $0x220] sm:$0xff]
  %v106 = vld [vmem:[%s1 + $0x228] sm:$0xff]
  %v107 = vld [vmem:[%s1 + $0x230] sm:$0xff]
  %v108 = vld [vmem:[%s1 + $0x238] sm:$0xff]
  %vm109 = vcmask 523264
  %v111 = vsel %vm109, %v21, 0
  %v114 = vsel %vm109, %v26, 0
  %v117 = vsel %vm109, %v31, 0
  %v120 = vsel %vm109, %v36, 0
  %122 = vmatprep.subr.mxu0 0.0
  %123 = vmatpush1.msra.mxu0 %v37
  %124 = vmatprep.subr.mxu0 0.0
  %125 = vmatpush1.msra.mxu0 %v38
  %126 = vmatprep.subr.mxu0 0.0
  %127 = vmatpush1.msra.mxu0 %v39
  %128 = vmatprep.subr.mxu0 0.0
  %129 = vmatpush1.msra.mxu0 %v40
  %130 = vmatprep.subr.mxu0 0.0
  %131 = vmatpush1.msra.mxu0 %v41
  %132 = vmatprep.subr.mxu0 0.0
  %133 = vmatpush1.msra.mxu0 %v42
  %134 = vmatprep.subr.mxu0 0.0
  %135 = vmatpush1.msra.mxu0 %v43
  %136 = vmatprep.subr.mxu0 0.0
  %137 = vmatpush1.msra.mxu0 %v44
  %138 = vmatprep.subr.mxu0 0.0
  %139 = vmatpush1.msra.mxu0 %v45
  %140 = vmatprep.subr.mxu0 0.0
  %141 = vmatpush1.msra.mxu0 %v46
  %142 = vmatprep.subr.mxu0 0.0
  %143 = vmatpush1.msra.mxu0 %v47
  %144 = vmatprep.subr.mxu0 0.0
  %145 = vmatpush1.msra.mxu0 %v48
  %146 = vmatprep.subr.mxu0 0.0
  %147 = vmatpush1.msra.mxu0 %v49
  %148 = vmatprep.subr.mxu0 0.0
  %149 = vmatpush1.msra.mxu0 %v50
  %150 = vmatprep.subr.mxu0 0.0
  %151 = vmatpush1.msra.mxu0 %v51
  %152 = vmatprep.subr.mxu0 0.0
  %153 = vmatpush1.msra.mxu0 %v52
  %154 = vmatprep.subr.mxu0 0.0
  %155 = vmatpush1.msra.mxu0 %v53
  %156 = vmatprep.subr.mxu0 0.0
  %157 = vmatpush1.msra.mxu0 %v54
  %158 = vmatprep.subr.mxu0 0.0
  %159 = vmatpush1.msra.mxu0 %v55
  %160 = vmatprep.subr.mxu0 0.0
  %161 = vmatpush1.msra.mxu0 %v56
  %162 = vmatprep.subr.mxu0 0.0
  %163 = vmatpush1.msra.mxu0 %v57
  %164 = vmatprep.subr.mxu0 0.0
  %165 = vmatpush1.msra.mxu0 %v58
  %166 = vmatprep.subr.mxu0 0.0
  %167 = vmatpush1.msra.mxu0 %v59
  %168 = vmatprep.subr.mxu0 0.0
  %169 = vmatpush1.msra.mxu0 %v60
  %170 = vmatprep.subr.mxu0 0.0
  %171 = vmatpush1.msra.mxu0 %v61
  %172 = vmatprep.subr.mxu0 0.0
  %173 = vmatpush1.msra.mxu0 %v62
  %174 = vmatprep.subr.mxu0 0.0
  %175 = vmatpush1.msra.mxu0 %v63
  %176 = vmatprep.subr.mxu0 0.0
  %177 = vmatpush1.msra.mxu0 %v64
  %178 = vmatprep.subr.mxu0 0.0
  %179 = vmatpush1.msra.mxu0 %v65
  %180 = vmatprep.subr.mxu0 0.0
  %181 = vmatpush1.msra.mxu0 %v66
  %182 = vmatprep.subr.mxu0 0.0
  %183 = vmatpush1.msra.mxu0 %v67
  %184 = vmatprep.subr.mxu0 0.0
  %185 = vmatpush1.msra.mxu0 %v68
  %186 = vmatprep.mubr.f32.mxu0 %v18
  %187 = vmatmul.mubr.f32.gmra.mrb[0].mxu0 %v17
  %v188 = vpop.f32.mrb[0].mxu0
  %v189 = vadd.f32 0.0, %v188
  %v190 = vpop.f32.mrb[0].mxu0
  %191 = vmatprep.mubr.f32.mxu0 %v23
  %192 = vmatmul.mubr.f32.gmra.mrb[0].mxu0 %v22
  %v193 = vpop.f32.mrb[0].mxu0
  %v194 = vadd.f32 0.0, %v193
  %v195 = vpop.f32.mrb[0].mxu0
  %196 = vmatprep.mubr.f32.mxu0 %v28
  %197 = vmatmul.mubr.f32.gmra.mrb[0].mxu0 %v27
  %v198 = vpop.f32.mrb[0].mxu0
  %v199 = vadd.f32 0.0, %v198
  %v200 = vpop.f32.mrb[0].mxu0
  %201 = vmatprep.mubr.f32.mxu0 %v33
  %202 = vmatmul.mubr.f32.gmra.mrb[0].mxu0 %v32
  %v203 = vpop.f32.mrb[0].mxu0
  %v204 = vadd.f32 0.0, %v203
  %v205 = vpop.f32.mrb[0].mxu0
  %206 = vdwg.mxu0
  %207 = vmatprep.subr.mxu0 0.0
  %208 = vmatpush1.msra.mxu0 %v69
  %209 = vmatprep.subr.mxu0 0.0
  %210 = vmatpush1.msra.mxu0 %v70
  %211 = vmatprep.subr.mxu0 0.0
  %212 = vmatpush1.msra.mxu0 %v71
  %213 = vmatprep.subr.mxu0 0.0
  %214 = vmatpush1.msra.mxu0 %v72
  %215 = vmatprep.subr.mxu0 0.0
  %216 = vmatpush1.msra.mxu0 %v73
  %217 = vmatprep.subr.mxu0 0.0
  %218 = vmatpush1.msra.mxu0 %v74
  %219 = vmatprep.subr.mxu0 0.0
  %220 = vmatpush1.msra.mxu0 %v75
  %221 = vmatprep.subr.mxu0 0.0
  %222 = vmatpush1.msra.mxu0 %v76
  %223 = vmatprep.subr.mxu0 0.0
  %224 = vmatpush1.msra.mxu0 %v77
  %225 = vmatprep.subr.mxu0 0.0
  %226 = vmatpush1.msra.mxu0 %v78
  %227 = vmatprep.subr.mxu0 0.0
  %228 = vmatpush1.msra.mxu0 %v79
  %229 = vmatprep.subr.mxu0 0.0
  %230 = vmatpush1.msra.mxu0 %v80
  %231 = vmatprep.subr.mxu0 0.0
  %232 = vmatpush1.msra.mxu0 %v81
  %233 = vmatprep.subr.mxu0 0.0
  %234 = vmatpush1.msra.mxu0 %v82
  %235 = vmatprep.subr.mxu0 0.0
  %236 = vmatpush1.msra.mxu0 %v83
  %237 = vmatprep.subr.mxu0 0.0
  %238 = vmatpush1.msra.mxu0 %v84
  %239 = vmatprep.subr.mxu0 0.0
  %240 = vmatpush1.msra.mxu0 %v85
  %241 = vmatprep.subr.mxu0 0.0
  %242 = vmatpush1.msra.mxu0 %v86
  %243 = vmatprep.subr.mxu0 0.0
  %244 = vmatpush1.msra.mxu0 %v87
  %245 = vmatprep.subr.mxu0 0.0
  %246 = vmatpush1.msra.mxu0 %v88
  %247 = vmatprep.subr.mxu0 0.0
  %248 = vmatpush1.msra.mxu0 %v89
  %249 = vmatprep.subr.mxu0 0.0
  %250 = vmatpush1.msra.mxu0 %v90
  %251 = vmatprep.subr.mxu0 0.0
  %252 = vmatpush1.msra.mxu0 %v91
  %253 = vmatprep.subr.mxu0 0.0
  %254 = vmatpush1.msra.mxu0 %v92
  %255 = vmatprep.subr.mxu0 0.0
  %256 = vmatpush1.msra.mxu0 %v93
  %257 = vmatprep.subr.mxu0 0.0
  %258 = vmatpush1.msra.mxu0 %v94
  %259 = vmatprep.subr.mxu0 0.0
  %260 = vmatpush1.msra.mxu0 %v95
  %261 = vmatprep.subr.mxu0 0.0
  %262 = vmatpush1.msra.mxu0 %v96
  %263 = vmatprep.subr.mxu0 0.0
  %264 = vmatpush1.msra.mxu0 %v97
  %265 = vmatprep.subr.mxu0 0.0
  %266 = vmatpush1.msra.mxu0 %v98
  %267 = vmatprep.subr.mxu0 0.0
  %268 = vmatpush1.msra.mxu0 %v99
  %269 = vmatprep.subr.mxu0 0.0
  %270 = vmatpush1.msra.mxu0 %v100
  %271 = vmatprep.mubr.f32.mxu0 %v20
  %272 = vmatmul.mubr.f32.gmra.mrb[0].mxu0 %v19
  %v273 = vpop.f32.mrb[0].mxu0
  %v274 = vadd.f32 %v189, %v273
  %v275 = vpop.f32.mrb[0].mxu0
  %276 = vmatprep.mubr.f32.mxu0 %v25
  %277 = vmatmul.mubr.f32.gmra.mrb[0].mxu0 %v24
  %v278 = vpop.f32.mrb[0].mxu0
  %v279 = vadd.f32 %v194, %v278
  %v280 = vpop.f32.mrb[0].mxu0
  %281 = vmatprep.mubr.f32.mxu0 %v30
  %282 = vmatmul.mubr.f32.gmra.mrb[0].mxu0 %v29
  %v283 = vpop.f32.mrb[0].mxu0
  %v284 = vadd.f32 %v199, %v283
  %v285 = vpop.f32.mrb[0].mxu0
  %286 = vmatprep.mubr.f32.mxu0 %v35
  %287 = vmatmul.mubr.f32.gmra.mrb[0].mxu0 %v34
  %v288 = vpop.f32.mrb[0].mxu0
  %v289 = vadd.f32 %v204, %v288
  %v290 = vpop.f32.mrb[0].mxu0
  %291 = vdwg.mxu0
  %292 = vmatprep.subr.mxu0 0.0
  %293 = vmatpush1.msra.mxu0 %v101
  %294 = vmatprep.subr.mxu0 0.0
  %295 = vmatpush1.msra.mxu0 %v102
  %296 = vmatprep.subr.mxu0 0.0
  %297 = vmatpush1.msra.mxu0 %v103
  %298 = vmatprep.subr.mxu0 0.0
  %299 = vmatpush1.msra.mxu0 %v104
  %300 = vmatprep.subr.mxu0 0.0
  %301 = vmatpush1.msra.mxu0 %v105
  %302 = vmatprep.subr.mxu0 0.0
  %303 = vmatpush1.msra.mxu0 %v106
  %304 = vmatprep.subr.mxu0 0.0
  %305 = vmatpush1.msra.mxu0 %v107
  %306 = vmatprep.subr.mxu0 0.0
  %307 = vmatpush1.msra.mxu0 %v108
  %308 = vmatprep.subr.mxu0 0.0
  %309 = vmatpush1.msra.mxu0 0.0
  %310 = vmatprep.subr.mxu0 0.0
  %311 = vmatpush1.msra.mxu0 0.0
  %312 = vmatprep.subr.mxu0 0.0
  %313 = vmatpush1.msra.mxu0 0.0
  %314 = vmatprep.subr.mxu0 0.0
  %315 = vmatpush1.msra.mxu0 0.0
  %316 = vmatprep.subr.mxu0 0.0
  %317 = vmatpush1.msra.mxu0 0.0
  %318 = vmatprep.subr.mxu0 0.0
  %319 = vmatpush1.msra.mxu0 0.0
  %320 = vmatprep.subr.mxu0 0.0
  %321 = vmatpush1.msra.mxu0 0.0
  %322 = vmatprep.subr.mxu0 0.0
  %323 = vmatpush1.msra.mxu0 0.0
  %324 = vmatprep.subr.mxu0 0.0
  %325 = vmatpush1.msra.mxu0 0.0
  %326 = vmatprep.subr.mxu0 0.0
  %327 = vmatpush1.msra.mxu0 0.0
  %328 = vmatprep.subr.mxu0 0.0
  %329 = vmatpush1.msra.mxu0 0.0
  %330 = vmatprep.subr.mxu0 0.0
  %331 = vmatpush1.msra.mxu0 0.0
  %332 = vmatprep.subr.mxu0 0.0
  %333 = vmatpush1.msra.mxu0 0.0
  %334 = vmatprep.subr.mxu0 0.0
  %335 = vmatpush1.msra.mxu0 0.0
  %336 = vmatprep.subr.mxu0 0.0
  %337 = vmatpush1.msra.mxu0 0.0
  %338 = vmatprep.subr.mxu0 0.0
  %339 = vmatpush1.msra.mxu0 0.0
  %340 = vmatprep.subr.mxu0 0.0
  %341 = vmatpush1.msra.mxu0 0.0
  %342 = vmatprep.subr.mxu0 0.0
  %343 = vmatpush1.msra.mxu0 0.0
  %344 = vmatprep.subr.mxu0 0.0
  %345 = vmatpush1.msra.mxu0 0.0
  %346 = vmatprep.subr.mxu0 0.0
  %347 = vmatpush1.msra.mxu0 0.0
  %348 = vmatprep.subr.mxu0 0.0
  %349 = vmatpush1.msra.mxu0 0.0
  %350 = vmatprep.subr.mxu0 0.0
  %351 = vmatpush1.msra.mxu0 0.0
  %352 = vmatprep.subr.mxu0 0.0
  %353 = vmatpush1.msra.mxu0 0.0
  %354 = vmatprep.subr.mxu0 0.0
  %355 = vmatpush1.msra.mxu0 0.0
  %356 = vmatprep.mubr.f32.mxu0 0.0
  %357 = vmatmul.mubr.f32.gmra.mrb[0].mxu0 %v111
  %v358 = vpop.f32.mrb[0].mxu0
  %v359 = vadd.f32 %v274, %v358
  %v360 = vpop.f32.mrb[0].mxu0
  %361 = vmatprep.mubr.f32.mxu0 0.0
  %362 = vmatmul.mubr.f32.gmra.mrb[0].mxu0 %v114
  %v363 = vpop.f32.mrb[0].mxu0
  %v364 = vadd.f32 %v279, %v363
  %v365 = vpop.f32.mrb[0].mxu0
  %366 = vmatprep.mubr.f32.mxu0 0.0
  %367 = vmatmul.mubr.f32.gmra.mrb[0].mxu0 %v117
  %v368 = vpop.f32.mrb[0].mxu0
  %v369 = vadd.f32 %v284, %v368
  %v370 = vpop.f32.mrb[0].mxu0
  %371 = vmatprep.mubr.f32.mxu0 0.0
  %372 = vmatmul.mubr.f32.gmra.mrb[0].mxu0 %v120
  %v373 = vpop.f32.mrb[0].mxu0
  %v374 = vadd.f32 %v289, %v373
  %v375 = vpop.f32.mrb[0].mxu0
  %376 = vdwg.mxu0
  %v377 = vadd.f32 %v359, %v364
  %v378 = vadd.f32 %v377, %v369
  %v379 = vadd.f32 %v378, %v374
  %v380 = vrot.slane %v379, 4
  %v381 = vadd.f32 %v379, %v380
  %v382 = vrot.slane %v381, 2
  %v383 = vadd.f32 %v381, %v382
  %v384 = vrot.slane %v383, 1
  %v385 = vadd.f32 %v383, %v384
  %v386 = vmul.f32 %v359, %v359
  %v387 = vmul.f32 %v364, %v364
  %v388 = vmul.f32 %v369, %v369
  %v389 = vmul.f32 %v374, %v374
  %v390 = vadd.f32 %v386, %v387
  %v391 = vadd.f32 %v390, %v388
  %v392 = vadd.f32 %v391, %v389
  %v393 = vrot.slane %v392, 4
  %v394 = vadd.f32 %v392, %v393
  %v395 = vrot.slane %v394, 2
  %v396 = vadd.f32 %v394, %v395
  %v397 = vrot.slane %v396, 1
  %v398 = vadd.f32 %v396, %v397
  %vm399 = vcmask 1040384
  %v400 = vsel %vm399, %v385, %v398
  %v401 = vld [vmem:[%s2] sm:$0xff]
  %v402 = vld [vmem:[%s2 + $0x8] sm:$0xff]
  %v403 = vld [vmem:[%s2 + $0x10] sm:$0xff]
  %v404 = vld [vmem:[%s2 + $0x18] sm:$0xff]
  %v405 = vld [vmem:[%s2 + $0x20] sm:$0xff]
  %v406 = vld [vmem:[%s2 + $0x28] sm:$0xff]
  %v407 = vld [vmem:[%s2 + $0x30] sm:$0xff]
  %v408 = vld [vmem:[%s2 + $0x38] sm:$0xff]
  %v409 = vld [vmem:[%s2 + $0x40] sm:$0xff]
  %v410 = vld [vmem:[%s2 + $0x48] sm:$0xff]
  %v411 = vld [vmem:[%s2 + $0x50] sm:$0xff]
  %v412 = vld [vmem:[%s2 + $0x58] sm:$0xff]
  %v413 = vld [vmem:[%s2 + $0x60] sm:$0xff]
  %v414 = vld [vmem:[%s2 + $0x68] sm:$0xff]
  %v415 = vld [vmem:[%s2 + $0x70] sm:$0xff]
  %v416 = vld [vmem:[%s2 + $0x78] sm:$0xff]
  %417 = vmatprep.subr.mxu0 0.0
  %418 = vmatpush1.msra.mxu0 %v401
  %419 = vmatprep.subr.mxu0 0.0
  %420 = vmatpush1.msra.mxu0 %v402
  %421 = vmatprep.subr.mxu0 0.0
  %422 = vmatpush1.msra.mxu0 %v403
  %423 = vmatprep.subr.mxu0 0.0
  %424 = vmatpush1.msra.mxu0 %v404
  %425 = vmatprep.subr.mxu0 0.0
  %426 = vmatpush1.msra.mxu0 %v405
  %427 = vmatprep.subr.mxu0 0.0
  %428 = vmatpush1.msra.mxu0 %v406
  %429 = vmatprep.subr.mxu0 0.0
  %430 = vmatpush1.msra.mxu0 %v407
  %431 = vmatprep.subr.mxu0 0.0
  %432 = vmatpush1.msra.mxu0 %v408
  %433 = vmatprep.subr.mxu0 0.0
  %434 = vmatpush1.msra.mxu0 %v409
  %435 = vmatprep.subr.mxu0 0.0
  %436 = vmatpush1.msra.mxu0 %v410
  %437 = vmatprep.subr.mxu0 0.0
  %438 = vmatpush1.msra.mxu0 %v411
  %439 = vmatprep.subr.mxu0 0.0
  %440 = vmatpush1.msra.mxu0 %v412
  %441 = vmatprep.subr.mxu0 0.0
  %442 = vmatpush1.msra.mxu0 %v413
  %443 = vmatprep.subr.mxu0 0.0
  %444 = vmatpush1.msra.mxu0 %v414
  %445 = vmatprep.subr.mxu0 0.0
  %446 = vmatpush1.msra.mxu0 %v415
  %447 = vmatprep.subr.mxu0 0.0
  %448 = vmatpush1.msra.mxu0 %v416
  %449 = vmatprep.subr.mxu0 0.0
  %450 = vmatpush1.msra.mxu0 0.0
  %451 = vmatprep.subr.mxu0 0.0
  %452 = vmatpush1.msra.mxu0 0.0
  %453 = vmatprep.subr.mxu0 0.0
  %454 = vmatpush1.msra.mxu0 0.0
  %455 = vmatprep.subr.mxu0 0.0
  %456 = vmatpush1.msra.mxu0 0.0
  %457 = vmatprep.subr.mxu0 0.0
  %458 = vmatpush1.msra.mxu0 0.0
  %459 = vmatprep.subr.mxu0 0.0
  %460 = vmatpush1.msra.mxu0 0.0
  %461 = vmatprep.subr.mxu0 0.0
  %462 = vmatpush1.msra.mxu0 0.0
  %463 = vmatprep.subr.mxu0 0.0
  %464 = vmatpush1.msra.mxu0 0.0
  %465 = vmatprep.subr.mxu0 0.0
  %466 = vmatpush1.msra.mxu0 0.0
  %467 = vmatprep.subr.mxu0 0.0
  %468 = vmatpush1.msra.mxu0 0.0
  %469 = vmatprep.subr.mxu0 0.0
  %470 = vmatpush1.msra.mxu0 0.0
  %471 = vmatprep.subr.mxu0 0.0
  %472 = vmatpush1.msra.mxu0 0.0
  %473 = vmatprep.subr.mxu0 0.0
  %474 = vmatpush1.msra.mxu0 0.0
  %475 = vmatprep.subr.mxu0 0.0
  %476 = vmatpush1.msra.mxu0 0.0
  %477 = vmatprep.subr.mxu0 0.0
  %478 = vmatpush1.msra.mxu0 0.0
  %479 = vmatprep.subr.mxu0 0.0
  %480 = vmatpush1.msra.mxu0 0.0
  %481 = vmatprep.mubr.f32.mxu0 0.0
  %482 = vmatmul.mubr.f32.gmra.mrb[0].mxu0 %v400
  %v483 = vpop.f32.mrb[0].mxu0
  %v484 = vadd.f32 0.0, %v483
  %v485 = vpop.f32.mrb[0].mxu0
  %486 = vdwg.mxu0
  %v487 = vmul.f32 %v484, 0.001953125
  %v488 = vmul.f32 %v487, %v487
  %v490 = vrot.slane %v488, 7
  %v492 = vsub.f32 %v487, %v490
  %v493 = vld [vmem:[%s3] sm:$0x1]
  %v494 = vadd.f32 %v492, 1e-05
  %v495 = vrsqrt.pop %v494
  %v497 = vrot.slane %v495, 1
  %v499 = vmul.f32 %v493, %v497
  %v500 = vld [vmem:[%s3 + $0x1] sm:$0x1]
  %v501 = vmul.f32 %v487, %v499
  %v502 = vsub.f32 %v500, %v501
  %v503 = vlaneseq
  %v504 = vshrl.u32 %v503, 7
  %v505 = vsub.s32 0, %v504
  %v506 = vrot.slane %v499, %v505
  %v507 = vmul.f32 %v359, %v506
  %v508 = vmul.f32 %v364, %v506
  %v509 = vmul.f32 %v369, %v506
  %v510 = vmul.f32 %v374, %v506
  %v511 = vlaneseq
  %v512 = vshrl.u32 %v511, 7
  %v513 = vsub.s32 0, %v512
  %v514 = vrot.slane %v502, %v513
  %v515 = vadd.f32 %v507, %v514
  %v516 = vadd.f32 %v508, %v514
  %v517 = vadd.f32 %v509, %v514
  %v518 = vadd.f32 %v510, %v514
  %v519 = vmax.f32 %v515, 0.0
  %v520 = vmax.f32 %v516, 0.0
  %v521 = vmax.f32 %v517, 0.0
  %v522 = vmax.f32 %v518, 0.0
  %523 = vst [vmem:[%s4] sm:$0xff] %v519
  %524 = vst [vmem:[%s4 + $0x8] sm:$0xff] %v520
  %525 = vst [vmem:[%s4 + $0x10] sm:$0xff] %v521
  %526 = vst [vmem:[%s4 + $0x18] sm:$0xff] %v522
  // Predicated region
  $region18: #{conv_block_forward.1} parent=0 // pred_check
    _
  $region19: #{conv_block_forward.1} parent=0 // pred_check_branch
    %528 = sbr.rel (0) target = $region21
  $region20: #{conv_block_forward.1} parent=0 // pred_region
    _
  $region21: #{conv_block_forward.1} parent=0 // pred_fallthru
    _
  // Predicated region
  $region22: #{conv_block_forward.1} parent=0 // pred_check
    _
  $region23: #{conv_block_forward.1} parent=0 // pred_check_branch
    %530 = sbr.rel (0) target = $region25
  $region24: #{conv_block_forward.1} parent=0 // pred_region
    _
  $region25: #{conv_block_forward.1} parent=0 // pred_fallthru
    _

</llo_original>
